<compile_context>
chip_gen: v7x
topology: tpu7x:2x2x1
jax: 0.10.0
libtpu: 0.0.40
codegen_flags: <defaults>
</compile_context>

<pallas_src>
import math

import jax
import jax.numpy as jnp
from jax import lax
from jax.experimental import pallas as pl
from jax.experimental.pallas import tpu as pltpu


# ---------------------------------------------------------------------------
# In-kernel helpers (traced inside the Pallas bodies).
# ---------------------------------------------------------------------------

def _project(x, w, b):
    """x: (Bt, S, D) f32 value, w: (D, O) bf16, b: (1, O) f32 -> (Bt, S, O) f32."""
    Bt, S, D = x.shape
    O = w.shape[1]
    if S % 8 == 0:
        # Fold the batch group into sublanes (layout-free for f32 when S is a
        # multiple of the 8-row sublane tile) -> one dense MXU matmul.
        y = jnp.dot(x.reshape(Bt * S, D).astype(jnp.bfloat16), w,
                    preferred_element_type=jnp.float32)
        return (y + b).reshape(Bt, S, O)
    # Guarded fallback: batched contraction, no flatten (avoids a relayout
    # copy when S is not sublane-tile aligned).
    y = lax.dot_general(x.astype(jnp.bfloat16), w,
                        dimension_numbers=(((2,), (0,)), ((), ())),
                        preferred_element_type=jnp.float32)
    return y + b


def _attend(q, k, v, out_dtype):
    """Scaled dot-product attention core; 1/sqrt(A) is pre-folded into q."""
    # scores = q @ k^T as a trans-B contraction on the MXU (no XLU transpose).
    scores = lax.dot_general(
        q.astype(jnp.bfloat16), k.astype(jnp.bfloat16),
        dimension_numbers=(((2,), (2,)), ((0,), (0,))),
        preferred_element_type=jnp.float32)                  # (Bt, Sq, Sk)
    # Numerically stable softmax in f32; reciprocal on the EUP (free slot).
    m = jnp.max(scores, axis=-1, keepdims=True)
    e = jnp.exp(scores - m)
    denom = jnp.sum(e, axis=-1, keepdims=True)
    w = e * pl.reciprocal(denom, approx=True)
    out = lax.dot_general(
        w.astype(jnp.bfloat16), v.astype(jnp.bfloat16),
        dimension_numbers=(((2,), (1,)), ((0,), (0,))),
        preferred_element_type=jnp.float32)                  # (Bt, Sq, A)
    return out.astype(out_dtype)


# ---------------------------------------------------------------------------
# Kernels.
# ---------------------------------------------------------------------------

def _cross_attention_kernel(qx_ref, kvx_ref, wq_ref, bq_ref, wkv_ref, bkv_ref,
                            o_ref):
    # qx (Bt,Sq,D), kvx (Bt,Sk,D), wq (D,A) [scale folded], bq (1,A),
    # wkv (D,2A) = [K | V] (K first: score-matmul operand starts at lane 0),
    # bkv (1,2A), o (Bt,Sq,A).
    A = wq_ref.shape[1]
    q = _project(qx_ref[...], wq_ref[...], bq_ref[...])
    kv = _project(kvx_ref[...], wkv_ref[...], bkv_ref[...])
    k = kv[:, :, :A]
    v = kv[:, :, A:]
    o_ref[...] = _attend(q, k, v, o_ref.dtype)


def _self_attention_kernel(x_ref, wqkv_ref, bqkv_ref, o_ref):
    # x (Bt,S,D), wqkv (D,3A) = [Q*scale | K | V], bqkv (1,3A), o (Bt,S,A).
    A = wqkv_ref.shape[1] // 3
    qkv = _project(x_ref[...], wqkv_ref[...], bqkv_ref[...])
    q = qkv[:, :, :A]
    k = qkv[:, :, A:2 * A]
    v = qkv[:, :, 2 * A:]
    o_ref[...] = _attend(q, k, v, o_ref.dtype)


# ---------------------------------------------------------------------------
# Host-side wrappers.
# ---------------------------------------------------------------------------

def prepare_attention_fusion_params(wq, bq, wk, bk, wv, bv):
    """Once-per-parameter-set weight prep (hoisted out of the per-call path).

    Takes torch-style Linear weights (A, D) and biases (A,).  Returns fused,
    pre-transposed, pre-scaled, bf16-cast weight slabs (f32 biases) for both
    the cross-attention and self-attention kernels.
    """
    A, D = wq.shape
    scale = 1.0 / math.sqrt(A)
    return {
        "A": A, "D": D,
        # Cross-attention path: Q separate (scale folded), [K | V] fused.
        "wq": (wq.T * scale).astype(jnp.bfloat16),                       # (D, A)
        "bq": (bq * scale).astype(jnp.float32)[None, :],                 # (1, A)
        "wkv": jnp.concatenate([wk.T, wv.T], axis=1).astype(jnp.bfloat16),   # (D, 2A)
        "bkv": jnp.concatenate([bk, bv]).astype(jnp.float32)[None, :],       # (1, 2A)
        # Self-attention path: [Q*scale | K | V] fused.
        "wqkv": jnp.concatenate([wq.T * scale, wk.T, wv.T],
                                axis=1).astype(jnp.bfloat16),            # (D, 3A)
        "bqkv": jnp.concatenate([bq * scale, bk, bv]
                                ).astype(jnp.float32)[None, :],          # (1, 3A)
    }


def _pick_batch_block(B, per_batch_bytes, requested):
    if requested is not None:
        if requested <= 0:
            raise ValueError(f"batch_block must be >= 1, got {requested}")
        bb = min(int(requested), B)
        while B % bb:
            bb -= 1
        return bb
    # Default: one grid step (whole batch packed into sublanes).  Only shrink
    # if the double-buffered in/out blocks would blow the conservative
    # (v5e, 16 MiB scoped) VMEM default.
    budget = 12 * 1024 * 1024
    bb = B
    while bb > 1 and (B % bb or 2 * bb * per_batch_bytes > budget):
        bb -= 1
    return bb


def _compiler_params(block_bytes):
    kwargs = {"dimension_semantics": ("parallel",)}
    # VMEM guard (mainly v7x, 64 MiB physical): bump the scoped limit when the
    # double-buffered blocks exceed the default.  At large D/A, tile the fused
    # 2A/3A weight axis with an extra grid dim instead of relying on this.
    if block_bytes > 16 * 1024 * 1024:
        kwargs["vmem_limit_bytes"] = int(min(block_bytes + (8 << 20), 56 << 20))
    return pltpu.CompilerParams(**kwargs)


def _cross_attention(q_x, kv_x, p, batch_block):
    B, Sq, D = q_x.shape
    Bk, Sk, Dk = kv_x.shape
    assert (B, D) == (Bk, Dk), "query / key-value batch & feature dims must match"
    A = p["A"]
    per_batch = 4 * (Sq * D + Sk * D + Sq * A)                 # f32 in/out bytes
    bb = _pick_batch_block(B, per_batch, batch_block)
    weight_bytes = 2 * (D * A + D * 2 * A) + 4 * (3 * A)       # bf16 slabs + f32 bias
    block_bytes = 2 * (bb * per_batch + weight_bytes)          # double-buffered
    grid = (B // bb,)
    return pl.pallas_call(
        _cross_attention_kernel,
        out_shape=jax.ShapeDtypeStruct((B, Sq, A), q_x.dtype),
        grid_spec=pl.GridSpec(
            grid=grid,
            in_specs=[
                pl.BlockSpec((bb, Sq, D), lambda b: (b, 0, 0)),
                pl.BlockSpec((bb, Sk, D), lambda b: (b, 0, 0)),
                pl.BlockSpec((D, A), lambda b: (0, 0)),
                pl.BlockSpec((1, A), lambda b: (0, 0)),
                pl.BlockSpec((D, 2 * A), lambda b: (0, 0)),
                pl.BlockSpec((1, 2 * A), lambda b: (0, 0)),
            ],
            out_specs=pl.BlockSpec((bb, Sq, A), lambda b: (b, 0, 0)),
        ),
        compiler_params=_compiler_params(block_bytes),
    )(q_x, kv_x, p["wq"], p["bq"], p["wkv"], p["bkv"])


def _self_attention(x, p, batch_block):
    B, S, D = x.shape
    A = p["A"]
    per_batch = 4 * (S * D + S * A)
    bb = _pick_batch_block(B, per_batch, batch_block)
    weight_bytes = 2 * (D * 3 * A) + 4 * (3 * A)
    block_bytes = 2 * (bb * per_batch + weight_bytes)
    grid = (B // bb,)
    return pl.pallas_call(
        _self_attention_kernel,
        out_shape=jax.ShapeDtypeStruct((B, S, A), x.dtype),
        grid_spec=pl.GridSpec(
            grid=grid,
            in_specs=[
                pl.BlockSpec((bb, S, D), lambda b: (b, 0, 0)),
                pl.BlockSpec((D, 3 * A), lambda b: (0, 0)),
                pl.BlockSpec((1, 3 * A), lambda b: (0, 0)),
            ],
            out_specs=pl.BlockSpec((bb, S, A), lambda b: (b, 0, 0)),
        ),
        compiler_params=_compiler_params(block_bytes),
    )(x, p["wqkv"], p["bqkv"])


def attention_fusion(q_x, kv_x, params, *, batch_block=None):
    """Fused AttentionFusion.forward.

    q_x: (B, Sq, D), kv_x: (B, Sk, D); params from
    prepare_attention_fusion_params.  Uses the fully fused [Q|K|V] projection
    when the same array is passed for both inputs (self-attention), else the
    cross-attention path with a fused [K|V] slab.
    """
    if q_x is kv_x:
        return _self_attention(q_x, params, batch_block)
    return _cross_attention(q_x, kv_x, params, batch_block)


def _reference(q_x, kv_x, wq, bq, wk, bk, wv, bv):
    q = q_x @ wq.T + bq
    k = kv_x @ wk.T + bk
    v = kv_x @ wv.T + bv
    scores = jnp.einsum("bqd,bkd->bqk", q, k) / jnp.sqrt(jnp.float32(q.shape[-1]))
    w = jax.nn.softmax(scores, axis=-1)
    return jnp.einsum("bqk,bkd->bqd", w, v)


if __name__ == "__main__":
    # Small shapes consistent with the module's forward.
    B, Sq, Sk = 2, 8, 8
    input_dim, attention_dim = 32, 32

    key = jax.random.PRNGKey(0)
    ks = jax.random.split(key, 8)

    # Deterministic parameter init (torch nn.Linear-style uniform bounds).
    bound = 1.0 / jnp.sqrt(jnp.float32(input_dim))
    wq = jax.random.uniform(ks[0], (attention_dim, input_dim), jnp.float32, -bound, bound)
    bq = jax.random.uniform(ks[1], (attention_dim,), jnp.float32, -bound, bound)
    wk = jax.random.uniform(ks[2], (attention_dim, input_dim), jnp.float32, -bound, bound)
    bk = jax.random.uniform(ks[3], (attention_dim,), jnp.float32, -bound, bound)
    wv = jax.random.uniform(ks[4], (attention_dim, input_dim), jnp.float32, -bound, bound)
    bv = jax.random.uniform(ks[5], (attention_dim,), jnp.float32, -bound, bound)

    q_x = jax.random.normal(ks[6], (B, Sq, input_dim), jnp.float32)
    kv_x = jax.random.normal(ks[7], (B, Sk, input_dim), jnp.float32)

    # Weight prep hoisted out of the per-call path (done once per param set).
    params = prepare_attention_fusion_params(wq, bq, wk, bk, wv, bv)

    # Cross-attention path (query input != key/value input).
    out = jax.block_until_ready(attention_fusion(q_x, kv_x, params))
    ref = _reference(q_x, kv_x, wq, bq, wk, bk, wv, bv)
    assert out.shape == (B, Sq, attention_dim)
    # bf16 MXU operands + approx reciprocal -> loose tolerance (inference-grade).
    assert jnp.allclose(out, ref, atol=3e-2, rtol=3e-2), "cross-attention mismatch"

    # Self-attention fast path (same array passed for both inputs).
    out_self = jax.block_until_ready(attention_fusion(q_x, q_x, params))
    ref_self = _reference(q_x, q_x, wq, bq, wk, bk, wv, bv)
    assert out_self.shape == (B, Sq, attention_dim)
    assert jnp.allclose(out_self, ref_self, atol=3e-2, rtol=3e-2), "self-attention mismatch"

    print("KERNEL_OK")
</pallas_src>

<mosaic_0001>
module attributes {stable_mosaic.version = 11 : i64} {
  func.func @_cross_attention_kernel(%arg0: i32, %arg1: memref<2x8x32xf32, #tpu.memory_space<vmem>>, %arg2: memref<2x8x32xf32, #tpu.memory_space<vmem>>, %arg3: memref<32x32xbf16, #tpu.memory_space<vmem>>, %arg4: memref<1x32xf32, #tpu.memory_space<vmem>>, %arg5: memref<32x64xbf16, #tpu.memory_space<vmem>>, %arg6: memref<1x64xf32, #tpu.memory_space<vmem>>, %arg7: memref<2x8x32xf32, #tpu.memory_space<vmem>>) attributes {dimension_semantics = [#tpu.dimension_semantics<parallel>], iteration_bounds = array<i64: 1>, scalar_prefetch = 0 : i64, scratch_operands = 0 : i64, tpu.core_type = #tpu.core_type<tc>, window_params = [{transform_indices = @transform_0, window_bounds = array<i64: 2, 8, 32>}, {transform_indices = @transform_1, window_bounds = array<i64: 2, 8, 32>}, {pipeline_mode = #tpu.pipeline_mode<synchronous>, transform_indices = @transform_2, window_bounds = array<i64: 32, 32>}, {pipeline_mode = #tpu.pipeline_mode<synchronous>, transform_indices = @transform_3, window_bounds = array<i64: 1, 32>}, {pipeline_mode = #tpu.pipeline_mode<synchronous>, transform_indices = @transform_4, window_bounds = array<i64: 32, 64>}, {pipeline_mode = #tpu.pipeline_mode<synchronous>, transform_indices = @transform_5, window_bounds = array<i64: 1, 64>}, {transform_indices = @transform_6, window_bounds = array<i64: 2, 8, 32>}]} {
    %c0 = arith.constant 0 : index
    %c0_0 = arith.constant 0 : index
    %c0_1 = arith.constant 0 : index
    %0 = vector.load %arg1[%c0, %c0_0, %c0_1] : memref<2x8x32xf32, #tpu.memory_space<vmem>>, vector<2x8x32xf32>
    %c0_2 = arith.constant 0 : index
    %c0_3 = arith.constant 0 : index
    %1 = vector.load %arg3[%c0_2, %c0_3] : memref<32x32xbf16, #tpu.memory_space<vmem>>, vector<32x32xbf16>
    %c0_4 = arith.constant 0 : index
    %c0_5 = arith.constant 0 : index
    %2 = vector.load %arg4[%c0_4, %c0_5] : memref<1x32xf32, #tpu.memory_space<vmem>>, vector<1x32xf32>
    %3 = vector.shape_cast %0 : vector<2x8x32xf32> to vector<16x32xf32>
    %4 = arith.truncf %3 : vector<16x32xf32> to vector<16x32xbf16>
    %cst = arith.constant dense<0.000000e+00> : vector<16x32xf32>
    %5 = tpu.matmul %4, %1, %cst {dimension_numbers = #tpu.dot_dimension_numbers<[1], [0], [0], [1], [0, 0, 1, 1], [], []>} : vector<16x32xbf16>, vector<32x32xbf16>, vector<16x32xf32> -> vector<16x32xf32>
    %6 = vector.broadcast %2 : vector<1x32xf32> to vector<16x32xf32>
    %7 = arith.addf %5, %6 : vector<16x32xf32>
    %8 = vector.shape_cast %7 : vector<16x32xf32> to vector<2x8x32xf32>
    %c0_6 = arith.constant 0 : index
    %c0_7 = arith.constant 0 : index
    %c0_8 = arith.constant 0 : index
    %9 = vector.load %arg2[%c0_6, %c0_7, %c0_8] : memref<2x8x32xf32, #tpu.memory_space<vmem>>, vector<2x8x32xf32>
    %c0_9 = arith.constant 0 : index
    %c0_10 = arith.constant 0 : index
    %10 = vector.load %arg5[%c0_9, %c0_10] : memref<32x64xbf16, #tpu.memory_space<vmem>>, vector<32x64xbf16>
    %c0_11 = arith.constant 0 : index
    %c0_12 = arith.constant 0 : index
    %11 = vector.load %arg6[%c0_11, %c0_12] : memref<1x64xf32, #tpu.memory_space<vmem>>, vector<1x64xf32>
    %12 = vector.shape_cast %9 : vector<2x8x32xf32> to vector<16x32xf32>
    %13 = arith.truncf %12 : vector<16x32xf32> to vector<16x32xbf16>
    %cst_13 = arith.constant dense<0.000000e+00> : vector<16x64xf32>
    %14 = tpu.matmul %13, %10, %cst_13 {dimension_numbers = #tpu.dot_dimension_numbers<[1], [0], [0], [1], [0, 0, 1, 1], [], []>} : vector<16x32xbf16>, vector<32x64xbf16>, vector<16x64xf32> -> vector<16x64xf32>
    %15 = vector.broadcast %11 : vector<1x64xf32> to vector<16x64xf32>
    %16 = arith.addf %14, %15 : vector<16x64xf32>
    %17 = vector.shape_cast %16 : vector<16x64xf32> to vector<2x8x64xf32>
    %18 = vector.extract_strided_slice %17 {offsets = [0, 0, 0], sizes = [2, 8, 32], strides = [1, 1, 1]} : vector<2x8x64xf32> to vector<2x8x32xf32>
    %19 = vector.extract_strided_slice %17 {offsets = [0, 0, 32], sizes = [2, 8, 32], strides = [1, 1, 1]} : vector<2x8x64xf32> to vector<2x8x32xf32>
    %20 = arith.truncf %8 : vector<2x8x32xf32> to vector<2x8x32xbf16>
    %21 = arith.truncf %18 : vector<2x8x32xf32> to vector<2x8x32xbf16>
    %cst_14 = arith.constant dense<0.000000e+00> : vector<2x8x8xf32>
    %22 = tpu.matmul %20, %21, %cst_14 {dimension_numbers = #tpu.dot_dimension_numbers<[2], [2], [1], [1], [0, 0, 0, 1, 1, 1], [0], [0]>} : vector<2x8x32xbf16>, vector<2x8x32xbf16>, vector<2x8x8xf32> -> vector<2x8x8xf32>
    %cst_15 = arith.constant dense<0xFF800000> : vector<2x8xf32>
    %23 = vector.multi_reduction <maximumf>, %22, %cst_15 [2] : vector<2x8x8xf32> to vector<2x8xf32>
    %24 = vector.shape_cast %23 : vector<2x8xf32> to vector<2x8x1xf32>
    %25 = vector.broadcast %24 : vector<2x8x1xf32> to vector<2x8x8xf32>
    %26 = arith.subf %22, %25 : vector<2x8x8xf32>
    %27 = math.exp %26 : vector<2x8x8xf32>
    %cst_16 = arith.constant dense<0.000000e+00> : vector<2x8xf32>
    %28 = vector.multi_reduction <add>, %27, %cst_16 [2] : vector<2x8x8xf32> to vector<2x8xf32>
    %29 = vector.shape_cast %28 : vector<2x8xf32> to vector<2x8x1xf32>
    %30 = tpu.reciprocal %29 {approx = true} : vector<2x8x1xf32> -> vector<2x8x1xf32>
    %31 = vector.broadcast %30 : vector<2x8x1xf32> to vector<2x8x8xf32>
    %32 = arith.mulf %27, %31 : vector<2x8x8xf32>
    %33 = arith.truncf %32 : vector<2x8x8xf32> to vector<2x8x8xbf16>
    %34 = arith.truncf %19 : vector<2x8x32xf32> to vector<2x8x32xbf16>
    %cst_17 = arith.constant dense<0.000000e+00> : vector<2x8x32xf32>
    %35 = tpu.matmul %33, %34, %cst_17 {dimension_numbers = #tpu.dot_dimension_numbers<[2], [1], [1], [2], [0, 0, 0, 1, 1, 2], [0], [0]>} : vector<2x8x8xbf16>, vector<2x8x32xbf16>, vector<2x8x32xf32> -> vector<2x8x32xf32>
    %c0_18 = arith.constant 0 : index
    %c0_19 = arith.constant 0 : index
    %c0_20 = arith.constant 0 : index
    %36 = vector.load %arg7[%c0_18, %c0_19, %c0_20] : memref<2x8x32xf32, #tpu.memory_space<vmem>>, vector<2x8x32xf32>
    tpu.vector_store %arg7[%c0_18, %c0_19, %c0_20], %35 {strides = array<i32>} : memref<2x8x32xf32, #tpu.memory_space<vmem>>, vector<2x8x32xf32>,
    return
  }
  func.func @transform_0(%arg0: i32) -> (i32, i32, i32) {
    %c0_i32 = arith.constant 0 : i32
    %c0_i32_0 = arith.constant 0 : i32
    %c0_i32_1 = arith.constant 0 : i32
    return %arg0, %c0_i32, %c0_i32_0 : i32, i32, i32
  }
  func.func @transform_1(%arg0: i32) -> (i32, i32, i32) {
    %c0_i32 = arith.constant 0 : i32
    %c0_i32_0 = arith.constant 0 : i32
    %c0_i32_1 = arith.constant 0 : i32
    return %arg0, %c0_i32, %c0_i32_0 : i32, i32, i32
  }
  func.func @transform_2(%arg0: i32) -> (i32, i32) {
    %c0_i32 = arith.constant 0 : i32
    %c0_i32_0 = arith.constant 0 : i32
    %c0_i32_1 = arith.constant 0 : i32
    return %c0_i32, %c0_i32_0 : i32, i32
  }
  func.func @transform_3(%arg0: i32) -> (i32, i32) {
    %c0_i32 = arith.constant 0 : i32
    %c0_i32_0 = arith.constant 0 : i32
    %c0_i32_1 = arith.constant 0 : i32
    return %c0_i32, %c0_i32_0 : i32, i32
  }
  func.func @transform_4(%arg0: i32) -> (i32, i32) {
    %c0_i32 = arith.constant 0 : i32
    %c0_i32_0 = arith.constant 0 : i32
    %c0_i32_1 = arith.constant 0 : i32
    return %c0_i32, %c0_i32_0 : i32, i32
  }
  func.func @transform_5(%arg0: i32) -> (i32, i32) {
    %c0_i32 = arith.constant 0 : i32
    %c0_i32_0 = arith.constant 0 : i32
    %c0_i32_1 = arith.constant 0 : i32
    return %c0_i32, %c0_i32_0 : i32, i32
  }
  func.func @transform_6(%arg0: i32) -> (i32, i32, i32) {
    %c0_i32 = arith.constant 0 : i32
    %c0_i32_0 = arith.constant 0 : i32
    %c0_i32_1 = arith.constant 0 : i32
    return %arg0, %c0_i32, %c0_i32_0 : i32, i32, i32
  }
}

</mosaic_0001>

<llo_original>
// kernel: tpu_custom_call.1
$region0: #{tpu_custom_call.1}
  #allocation0 [shape = 'u32[]', space=smem, size = 0x4, offset = 0x4, fixed_abs, tag = 'smem constant byte address 0x4 - core index']
  #allocation1 [shape = 'u32[144,128]{1,0:T(1,128)}', space=vmem, size = 0x12000, scoped, tag = 'internal scratch']
  %s0 = inlined_call_operand.hbm [shape: f32[2,8,32], index: 0, kind: input, shape index: {}]
  %s1 = inlined_call_operand.hbm [shape: f32[2,8,32], index: 1, kind: input, shape index: {}]
  %s2 = inlined_call_operand.hbm [shape: bf16[32,32], index: 2, kind: input, shape index: {}]
  %s3 = inlined_call_operand.vmem [shape: f32[1,32], index: 3, kind: input, shape index: {}]
  %s4 = inlined_call_operand.hbm [shape: bf16[32,64], index: 4, kind: input, shape index: {}]
  %s5 = inlined_call_operand.vmem [shape: f32[1,64], index: 5, kind: input, shape index: {}]
  %s6 = inlined_call_operand.hbm [shape: f32[2,8,32], index: 6, kind: output, shape index: {}]
  %s7 = sld [smem:[#allocation0]]
  $region50: #{tpu_custom_call.1} parent=0
    _
  %s9 = ssub.s32 1, %s7
  %s10 = scalar_select 0, %s9, %s7
  $region1: #{tpu_custom_call.1} parent=0
    #allocation2 [shape = 'u8[8192]{0}', space=vmem, size = 0x2000, scoped, tag = 'input window, operand 0, single buffered']
    #allocation3 [shape = 's32[1]{0}', space=sflag, size = 0x4, scoped, tag = 'scoped memory for tpu_custom_call.1']
    #allocation4 [shape = 's32[1]{0}', space=sflag, size = 0x4, scoped, tag = 'scoped memory for tpu_custom_call.1']
    #allocation5 [shape = 'u8[8192]{0}', space=vmem, size = 0x2000, scoped, tag = 'input window, operand 1, single buffered']
    #allocation6 [shape = 's32[1]{0}', space=sflag, size = 0x4, scoped, tag = 'scoped memory for tpu_custom_call.1']
    #allocation7 [shape = 'u8[8192]{0}', space=vmem, size = 0x2000, scoped, tag = 'input window, operand 2, single buffered']
    #allocation8 [shape = 'u8[8192]{0}', space=vmem, size = 0x2000, scoped, tag = 'input window, operand 4, single buffered']
    #allocation9 [shape = 's32[1]{0}', space=sflag, size = 0x4, scoped, tag = 'scoped memory for tpu_custom_call.1']
    #allocation10 [shape = 'u8[8192]{0}', space=vmem, size = 0x2000, scoped, tag = 'output window, operand 0, single buffered']
    %11 = vsyncpa [#allocation3], 0
    %12 = vsyncpa [#allocation6], 0
    %13 = vsyncpa [#allocation9], 0
    %14 = vsyncpa [#allocation4], 0
    // Predicated region
    $region2: #{tpu_custom_call.1} parent=1 // pred_check
      _
    $region3: #{tpu_custom_call.1} parent=1 // pred_check_branch
      %16 = sbr.rel (0) target = $region5
    $region4: #{tpu_custom_call.1} parent=1 // pred_region
      %s18 = ssub.s32 256, 256
      %19 = vsyncadd [#allocation3], %s18
      %s20 = sshll.u32 [#allocation2], 4
      %s21 = int_to_ptr.vmem [resolvable:$true] %s20
      %26 = dma.hbm_to_vmem [thread:$0]  %s0, 256, %s21, [#allocation3], 128, 128, 8
    $region5: #{tpu_custom_call.1} parent=1 // pred_fallthru
      _
    // Predicated region
    $region6: #{tpu_custom_call.1} parent=1 // pred_check
      _
    $region7: #{tpu_custom_call.1} parent=1 // pred_check_branch
      %28 = sbr.rel (0) target = $region9
    $region8: #{tpu_custom_call.1} parent=1 // pred_region
      %s30 = ssub.s32 256, 256
      %31 = vsyncadd [#allocation6], %s30
      %s32 = sshll.u32 [#allocation5], 4
      %s33 = int_to_ptr.vmem [resolvable:$true] %s32
      %38 = dma.hbm_to_vmem [thread:$0]  %s1, 256, %s33, [#allocation6], 128, 128, 8
    $region9: #{tpu_custom_call.1} parent=1 // pred_fallthru
      _
    // Predicated region
    $region10: #{tpu_custom_call.1} parent=1 // pred_check
      _
    $region11: #{tpu_custom_call.1} parent=1 // pred_check_branch
      %40 = sbr.rel (0) target = $region13
    $region12: #{tpu_custom_call.1} parent=1 // pred_region
      %s42 = ssub.s32 256, 256
      %43 = vsyncadd [#allocation6], %s42
      %s44 = sshll.u32 [#allocation7], 4
      %s45 = int_to_ptr.vmem [resolvable:$true] %s44
      %50 = dma.hbm_to_vmem [thread:$0]  %s2, 256, %s45, [#allocation6], 64, 64, 4
    $region13: #{tpu_custom_call.1} parent=1 // pred_fallthru
      _
    // Predicated region
    $region14: #{tpu_custom_call.1} parent=1 // pred_check
      _
    $region15: #{tpu_custom_call.1} parent=1 // pred_check_branch
      %52 = sbr.rel (0) target = $region17
    $region16: #{tpu_custom_call.1} parent=1 // pred_region
      _
    $region17: #{tpu_custom_call.1} parent=1 // pred_fallthru
      _
    // Predicated region
    $region18: #{tpu_custom_call.1} parent=1 // pred_check
      _
    $region19: #{tpu_custom_call.1} parent=1 // pred_check_branch
      %54 = sbr.rel (0) target = $region21
    $region20: #{tpu_custom_call.1} parent=1 // pred_region
      %s56 = ssub.s32 256, 256
      %57 = vsyncadd [#allocation9], %s56
      %s58 = sshll.u32 [#allocation8], 4
      %s59 = int_to_ptr.vmem [resolvable:$true] %s58
      %64 = dma.hbm_to_vmem [thread:$0]  %s4, 256, %s59, [#allocation9], 64, 64, 4
    $region21: #{tpu_custom_call.1} parent=1 // pred_fallthru
      _
    // Predicated region
    $region22: #{tpu_custom_call.1} parent=1 // pred_check
      _
    $region23: #{tpu_custom_call.1} parent=1 // pred_check_branch
      %66 = sbr.rel (0) target = $region25
    $region24: #{tpu_custom_call.1} parent=1 // pred_region
      _
    $region25: #{tpu_custom_call.1} parent=1 // pred_fallthru
      _
    // Predicated region
    $region26: #{tpu_custom_call.1} parent=1 // pred_check
      _
    $region27: #{tpu_custom_call.1} parent=1 // pred_check_branch
      %68 = sbr.rel (0) target = $region29
    $region28: #{tpu_custom_call.1} parent=1 // pred_region
      %69 = dma.done [#allocation3], 256
    $region29: #{tpu_custom_call.1} parent=1 // pred_fallthru
      _
    // Predicated region
    $region30: #{tpu_custom_call.1} parent=1 // pred_check
      _
    $region31: #{tpu_custom_call.1} parent=1 // pred_check_branch
      %71 = sbr.rel (0) target = $region33
    $region32: #{tpu_custom_call.1} parent=1 // pred_region
      %72 = dma.done [#allocation6], 256
    $region33: #{tpu_custom_call.1} parent=1 // pred_fallthru
      _
    // Predicated region
    $region34: #{tpu_custom_call.1} parent=1 // pred_check
      _
    $region35: #{tpu_custom_call.1} parent=1 // pred_check_branch
      %74 = sbr.rel (0) target = $region37
    $region36: #{tpu_custom_call.1} parent=1 // pred_region
      %75 = dma.done [#allocation6], 256
    $region37: #{tpu_custom_call.1} parent=1 // pred_fallthru
      _
    // Predicated region
    $region38: #{tpu_custom_call.1} parent=1 // pred_check
      _
    $region39: #{tpu_custom_call.1} parent=1 // pred_check_branch
      %77 = sbr.rel (0) target = $region41
    $region40: #{tpu_custom_call.1} parent=1 // pred_region
      %78 = dma.done [#allocation9], 256
    $region41: #{tpu_custom_call.1} parent=1 // pred_fallthru
      _
    %v80 = vld [vmem:[#allocation2] sm:$0xff]
    %v81 = vld [vmem:[#allocation2 + $0x8] sm:$0xff]
    %v82 = vld [vmem:[#allocation7] sm:$0xf]
    %v83 = vld [vmem:[#allocation7 + $0x4] sm:$0xf]
    %v84 = vld [vmem:[#allocation7 + $0x8] sm:$0xf]
    %v85 = vld [vmem:[#allocation7 + $0xc] sm:$0xf]
    %v86 = vld [vmem:[%s3] sm:$0x1]
    %v87 = vpack.c.bf16 %v81, %v80
    %v89 = vlaneseq
    %v90 = vshrl.u32 %v89, 7
    %v91 = vsub.s32 0, %v90
    %v92 = vrot.slane %v86, %v91
    %v98 = vunpack.c.l.b16 %v82
    %v99 = vunpack.c.l.b16 %v83
    %v100 = vunpack.c.l.b16 %v84
    %v101 = vunpack.c.l.b16 %v85
    %v102 = vpack.c.b16 %v99, %v98
    %v103 = vpack.c.b16 %v101, %v100
    %vm106 = vcmask 261120
    %v108 = vsel %vm106, %v87, 0
    %110 = vmatprep.subr.bf16.mxu0 0
    %111 = vmatpush1.bf16.msra.mxu0 %v102
    %112 = vmatprep.subr.bf16.mxu0 0
    %113 = vmatpush1.bf16.msra.mxu0 %v103
    %114 = vmatprep.subr.bf16.mxu0 0
    %115 = vmatpush1.bf16.msra.mxu0 0
    %116 = vmatprep.subr.bf16.mxu0 0
    %117 = vmatpush1.bf16.msra.mxu0 0
    %118 = vmatprep.subr.bf16.mxu0 0
    %119 = vmatpush1.bf16.msra.mxu0 0
    %120 = vmatprep.subr.bf16.mxu0 0
    %121 = vmatpush1.bf16.msra.mxu0 0
    %122 = vmatprep.subr.bf16.mxu0 0
    %123 = vmatpush1.bf16.msra.mxu0 0
    %124 = vmatprep.subr.bf16.mxu0 0
    %125 = vmatpush1.bf16.msra.mxu0 0
    %126 = vmatprep.subr.bf16.mxu0 0
    %127 = vmatpush1.bf16.msra.mxu0 0
    %128 = vmatprep.subr.bf16.mxu0 0
    %129 = vmatpush1.bf16.msra.mxu0 0
    %130 = vmatprep.subr.bf16.mxu0 0
    %131 = vmatpush1.bf16.msra.mxu0 0
    %132 = vmatprep.subr.bf16.mxu0 0
    %133 = vmatpush1.bf16.msra.mxu0 0
    %134 = vmatprep.subr.bf16.mxu0 0
    %135 = vmatpush1.bf16.msra.mxu0 0
    %136 = vmatprep.subr.bf16.mxu0 0
    %137 = vmatpush1.bf16.msra.mxu0 0
    %138 = vmatprep.subr.bf16.mxu0 0
    %139 = vmatpush1.bf16.msra.mxu0 0
    %140 = vmatprep.subr.bf16.mxu0 0
    %141 = vmatpush1.bf16.msra.mxu0 0
    %142 = vmatprep.mubr.bf16.mxu0 0
    %143 = vmatmul.mubr.bf16.gmra.mrb[0].mxu0 %v108
    %v144 = vpop.f32.mrb[0].mxu0
    %v145 = vadd.f32 %v92, %v144
    %v146 = vpop.f32.mrb[0].mxu0
    %v147 = vpop.f32.mrb[0].mxu0
    %v148 = vadd.f32 %v92, %v147
    %v149 = vpop.f32.mrb[0].mxu0
    %150 = vdwg.mxu0
    %v151 = vld [vmem:[#allocation5] sm:$0xff]
    %v152 = vld [vmem:[#allocation5 + $0x8] sm:$0xff]
    %v153 = vld [vmem:[#allocation8] sm:$0xf]
    %v154 = vld [vmem:[#allocation8 + $0x4] sm:$0xf]
    %v155 = vld [vmem:[#allocation8 + $0x8] sm:$0xf]
    %v156 = vld [vmem:[#allocation8 + $0xc] sm:$0xf]
    %v157 = vld [vmem:[%s5] sm:$0x1]
    %v158 = vpack.c.bf16 %v152, %v151
    %v160 = vlaneseq
    %v161 = vshrl.u32 %v160, 7
    %v162 = vsub.s32 0, %v161
    %v163 = vrot.slane %v157, %v162
    %v169 = vunpack.c.l.b16 %v153
    %v170 = vunpack.c.l.b16 %v154
    %v171 = vunpack.c.l.b16 %v155
    %v172 = vunpack.c.l.b16 %v156
    %v173 = vpack.c.b16 %v170, %v169
    %v174 = vpack.c.b16 %v172, %v171
    %v178 = vsel %vm106, %v158, 0
    %180 = vmatprep.subr.bf16.mxu0 0
    %181 = vmatpush1.bf16.msra.mxu0 %v173
    %182 = vmatprep.subr.bf16.mxu0 0
    %183 = vmatpush1.bf16.msra.mxu0 %v174
    %184 = vmatprep.subr.bf16.mxu0 0
    %185 = vmatpush1.bf16.msra.mxu0 0
    %186 = vmatprep.subr.bf16.mxu0 0
    %187 = vmatpush1.bf16.msra.mxu0 0
    %188 = vmatprep.subr.bf16.mxu0 0
    %189 = vmatpush1.bf16.msra.mxu0 0
    %190 = vmatprep.subr.bf16.mxu0 0
    %191 = vmatpush1.bf16.msra.mxu0 0
    %192 = vmatprep.subr.bf16.mxu0 0
    %193 = vmatpush1.bf16.msra.mxu0 0
    %194 = vmatprep.subr.bf16.mxu0 0
    %195 = vmatpush1.bf16.msra.mxu0 0
    %196 = vmatprep.subr.bf16.mxu0 0
    %197 = vmatpush1.bf16.msra.mxu0 0
    %198 = vmatprep.subr.bf16.mxu0 0
    %199 = vmatpush1.bf16.msra.mxu0 0
    %200 = vmatprep.subr.bf16.mxu0 0
    %201 = vmatpush1.bf16.msra.mxu0 0
    %202 = vmatprep.subr.bf16.mxu0 0
    %203 = vmatpush1.bf16.msra.mxu0 0
    %204 = vmatprep.subr.bf16.mxu0 0
    %205 = vmatpush1.bf16.msra.mxu0 0
    %206 = vmatprep.subr.bf16.mxu0 0
    %207 = vmatpush1.bf16.msra.mxu0 0
    %208 = vmatprep.subr.bf16.mxu0 0
    %209 = vmatpush1.bf16.msra.mxu0 0
    %210 = vmatprep.subr.bf16.mxu0 0
    %211 = vmatpush1.bf16.msra.mxu0 0
    %212 = vmatprep.mubr.bf16.mxu0 0
    %213 = vmatmul.mubr.bf16.gmra.mrb[0].mxu0 %v178
    %v214 = vpop.f32.mrb[0].mxu0
    %v215 = vadd.f32 %v163, %v214
    %v216 = vpop.f32.mrb[0].mxu0
    %v217 = vpop.f32.mrb[0].mxu0
    %v218 = vadd.f32 %v163, %v217
    %v219 = vpop.f32.mrb[0].mxu0
    %220 = vdwg.mxu0
    %v221 = vpack.c.bf16 %v145, %v145
    %v222 = vpack.c.bf16 %v148, %v148
    %v223 = vpack.c.bf16 %v215, %v215
    %v224 = vpack.c.bf16 %v218, %v218
    %v226 = vsel %vm106, %v221, 0
    %v229 = vsel %vm106, %v223, 0
    %231 = vmatprep.subr.bf16.mxu0 0
    %232 = vmatpush1.bf16.xpose.msra.mxu0 %v229
    %233 = vmatprep.subr.bf16.mxu0 0
    %234 = vmatpush1.bf16.xpose.msra.mxu0 0
    %235 = vmatprep.subr.bf16.mxu0 0
    %236 = vmatpush1.bf16.xpose.msra.mxu0 0
    %237 = vmatprep.subr.bf16.mxu0 0
    %238 = vmatpush1.bf16.xpose.msra.mxu0 0
    %239 = vmatprep.subr.bf16.mxu0 0
    %240 = vmatpush1.bf16.xpose.msra.mxu0 0
    %241 = vmatprep.subr.bf16.mxu0 0
    %242 = vmatpush1.bf16.xpose.msra.mxu0 0
    %243 = vmatprep.subr.bf16.mxu0 0
    %244 = vmatpush1.bf16.xpose.msra.mxu0 0
    %245 = vmatprep.subr.bf16.mxu0 0
    %246 = vmatpush1.bf16.xpose.msra.mxu0 0
    %247 = vmatprep.subr.bf16.mxu0 0
    %248 = vmatpush1.bf16.xpose.msra.mxu0 0
    %249 = vmatprep.subr.bf16.mxu0 0
    %250 = vmatpush1.bf16.xpose.msra.mxu0 0
    %251 = vmatprep.subr.bf16.mxu0 0
    %252 = vmatpush1.bf16.xpose.msra.mxu0 0
    %253 = vmatprep.subr.bf16.mxu0 0
    %254 = vmatpush1.bf16.xpose.msra.mxu0 0
    %255 = vmatprep.subr.bf16.mxu0 0
    %256 = vmatpush1.bf16.xpose.msra.mxu0 0
    %257 = vmatprep.subr.bf16.mxu0 0
    %258 = vmatpush1.bf16.xpose.msra.mxu0 0
    %259 = vmatprep.subr.bf16.mxu0 0
    %260 = vmatpush1.bf16.xpose.msra.mxu0 0
    %261 = vmatprep.subr.bf16.mxu0 0
    %262 = vmatpush1.bf16.xpose.msra.mxu0 0
    %263 = vmatprep.mubr.bf16.mxu0 0
    %264 = vmatmul.mubr.bf16.gmra.mrb[0].mxu0 %v226
    %v265 = vpop.f32.mrb[0].mxu0
    %v266 = vadd.f32 0.0, %v265
    %v267 = vpop.f32.mrb[0].mxu0
    %v268 = vpop.f32.mrb[0].mxu0
    %v269 = vpop.f32.mrb[0].mxu0
    %270 = vdwg.mxu0
    %v272 = vsel %vm106, %v222, 0
    %v275 = vsel %vm106, %v224, 0
    %277 = vmatprep.subr.bf16.mxu0 0
    %278 = vmatpush1.bf16.xpose.msra.mxu0 %v275
    %279 = vmatprep.subr.bf16.mxu0 0
    %280 = vmatpush1.bf16.xpose.msra.mxu0 0
    %281 = vmatprep.subr.bf16.mxu0 0
    %282 = vmatpush1.bf16.xpose.msra.mxu0 0
    %283 = vmatprep.subr.bf16.mxu0 0
    %284 = vmatpush1.bf16.xpose.msra.mxu0 0
    %285 = vmatprep.subr.bf16.mxu0 0
    %286 = vmatpush1.bf16.xpose.msra.mxu0 0
    %287 = vmatprep.subr.bf16.mxu0 0
    %288 = vmatpush1.bf16.xpose.msra.mxu0 0
    %289 = vmatprep.subr.bf16.mxu0 0
    %290 = vmatpush1.bf16.xpose.msra.mxu0 0
    %291 = vmatprep.subr.bf16.mxu0 0
    %292 = vmatpush1.bf16.xpose.msra.mxu0 0
    %293 = vmatprep.subr.bf16.mxu0 0
    %294 = vmatpush1.bf16.xpose.msra.mxu0 0
    %295 = vmatprep.subr.bf16.mxu0 0
    %296 = vmatpush1.bf16.xpose.msra.mxu0 0
    %297 = vmatprep.subr.bf16.mxu0 0
    %298 = vmatpush1.bf16.xpose.msra.mxu0 0
    %299 = vmatprep.subr.bf16.mxu0 0
    %300 = vmatpush1.bf16.xpose.msra.mxu0 0
    %301 = vmatprep.subr.bf16.mxu0 0
    %302 = vmatpush1.bf16.xpose.msra.mxu0 0
    %303 = vmatprep.subr.bf16.mxu0 0
    %304 = vmatpush1.bf16.xpose.msra.mxu0 0
    %305 = vmatprep.subr.bf16.mxu0 0
    %306 = vmatpush1.bf16.xpose.msra.mxu0 0
    %307 = vmatprep.subr.bf16.mxu0 0
    %308 = vmatpush1.bf16.xpose.msra.mxu0 0
    %309 = vmatprep.mubr.bf16.mxu0 0
    %310 = vmatmul.mubr.bf16.gmra.mrb[0].mxu0 %v272
    %v311 = vpop.f32.mrb[0].mxu0
    %v312 = vadd.f32 0.0, %v311
    %v313 = vpop.f32.mrb[0].mxu0
    %v314 = vpop.f32.mrb[0].mxu0
    %v315 = vpop.f32.mrb[0].mxu0
    %316 = vdwg.mxu0
    %vm317 = vcmask 64512
    %v318 = vsel %vm317, %v266, -inf
    %319 = vmax.xlane.f32.xlu0 %v318
    %v320 = vpop.xlane.xlu0 %319
    %v321 = vsel %vm317, %v312, -inf
    %322 = vmax.xlane.f32.xlu0 %v321
    %v323 = vpop.xlane.xlu0 %322
    %v324 = vsub.f32 %v266, %v320
    %v325 = vsub.f32 %v312, %v323
    %v326 = vmul.f32 %v324, 1.442695
    %v327 = vpow.pop %v326
    %v328 = vmul.f32 %v325, 1.442695
    %v329 = vpow.pop %v328
    %v330 = vsel %vm317, %v327, 0.0
    %331 = vadd.xlane.f32.xlu0 %v330
    %v332 = vpop.xlane.xlu0 %331
    %v333 = vsel %vm317, %v329, 0.0
    %334 = vadd.xlane.f32.xlu0 %v333
    %v335 = vpop.xlane.xlu0 %334
    %v336 = vrcp.pop %v332
    %v337 = vrcp.pop %v335
    %v338 = vmul.f32 %v327, %v336
    %v339 = vmul.f32 %v329, %v337
    %v340 = vpack.c.bf16 %v338, %v338
    %v341 = vpack.c.bf16 %v339, %v339
    %343 = vrot.lane.b32.xlu0 %v223, 96
    %v344 = vpop.permute.xlu0 %343
    %v346 = vsel %vm317, %v340, 0
    %vm348 = vcmask 1043456
    %v350 = vsel %vm348, %v344, 0
    %352 = vmatprep.subr.bf16.mxu0 0
    %353 = vmatpush1.bf16.msra.mxu0 %v350
    %354 = vmatprep.subr.bf16.mxu0 0
    %355 = vmatpush1.bf16.msra.mxu0 0
    %356 = vmatprep.subr.bf16.mxu0 0
    %357 = vmatpush1.bf16.msra.mxu0 0
    %358 = vmatprep.subr.bf16.mxu0 0
    %359 = vmatpush1.bf16.msra.mxu0 0
    %360 = vmatprep.subr.bf16.mxu0 0
    %361 = vmatpush1.bf16.msra.mxu0 0
    %362 = vmatprep.subr.bf16.mxu0 0
    %363 = vmatpush1.bf16.msra.mxu0 0
    %364 = vmatprep.subr.bf16.mxu0 0
    %365 = vmatpush1.bf16.msra.mxu0 0
    %366 = vmatprep.subr.bf16.mxu0 0
    %367 = vmatpush1.bf16.msra.mxu0 0
    %368 = vmatprep.subr.bf16.mxu0 0
    %369 = vmatpush1.bf16.msra.mxu0 0
    %370 = vmatprep.subr.bf16.mxu0 0
    %371 = vmatpush1.bf16.msra.mxu0 0
    %372 = vmatprep.subr.bf16.mxu0 0
    %373 = vmatpush1.bf16.msra.mxu0 0
    %374 = vmatprep.subr.bf16.mxu0 0
    %375 = vmatpush1.bf16.msra.mxu0 0
    %376 = vmatprep.subr.bf16.mxu0 0
    %377 = vmatpush1.bf16.msra.mxu0 0
    %378 = vmatprep.subr.bf16.mxu0 0
    %379 = vmatpush1.bf16.msra.mxu0 0
    %380 = vmatprep.subr.bf16.mxu0 0
    %381 = vmatpush1.bf16.msra.mxu0 0
    %382 = vmatprep.subr.bf16.mxu0 0
    %383 = vmatpush1.bf16.msra.mxu0 0
    %384 = vmatprep.mubr.bf16.mxu0 0
    %385 = vmatmul.mubr.bf16.gmra.mrb[0].mxu0 %v346
    %v386 = vpop.f32.mrb[0].mxu0
    %v387 = vadd.f32 0.0, %v386
    %v388 = vpop.f32.mrb[0].mxu0
    %v389 = vpop.f32.mrb[0].mxu0
    %v390 = vpop.f32.mrb[0].mxu0
    %391 = vdwg.mxu0
    %393 = vrot.lane.b32.xlu0 %v224, 96
    %v394 = vpop.permute.xlu0 %393
    %v396 = vsel %vm317, %v341, 0
    %v399 = vsel %vm348, %v394, 0
    %401 = vmatprep.subr.bf16.mxu0 0
    %402 = vmatpush1.bf16.msra.mxu0 %v399
    %403 = vmatprep.subr.bf16.mxu0 0
    %404 = vmatpush1.bf16.msra.mxu0 0
    %405 = vmatprep.subr.bf16.mxu0 0
    %406 = vmatpush1.bf16.msra.mxu0 0
    %407 = vmatprep.subr.bf16.mxu0 0
    %408 = vmatpush1.bf16.msra.mxu0 0
    %409 = vmatprep.subr.bf16.mxu0 0
    %410 = vmatpush1.bf16.msra.mxu0 0
    %411 = vmatprep.subr.bf16.mxu0 0
    %412 = vmatpush1.bf16.msra.mxu0 0
    %413 = vmatprep.subr.bf16.mxu0 0
    %414 = vmatpush1.bf16.msra.mxu0 0
    %415 = vmatprep.subr.bf16.mxu0 0
    %416 = vmatpush1.bf16.msra.mxu0 0
    %417 = vmatprep.subr.bf16.mxu0 0
    %418 = vmatpush1.bf16.msra.mxu0 0
    %419 = vmatprep.subr.bf16.mxu0 0
    %420 = vmatpush1.bf16.msra.mxu0 0
    %421 = vmatprep.subr.bf16.mxu0 0
    %422 = vmatpush1.bf16.msra.mxu0 0
    %423 = vmatprep.subr.bf16.mxu0 0
    %424 = vmatpush1.bf16.msra.mxu0 0
    %425 = vmatprep.subr.bf16.mxu0 0
    %426 = vmatpush1.bf16.msra.mxu0 0
    %427 = vmatprep.subr.bf16.mxu0 0
    %428 = vmatpush1.bf16.msra.mxu0 0
    %429 = vmatprep.subr.bf16.mxu0 0
    %430 = vmatpush1.bf16.msra.mxu0 0
    %431 = vmatprep.subr.bf16.mxu0 0
    %432 = vmatpush1.bf16.msra.mxu0 0
    %433 = vmatprep.mubr.bf16.mxu0 0
    %434 = vmatmul.mubr.bf16.gmra.mrb[0].mxu0 %v396
    %v435 = vpop.f32.mrb[0].mxu0
    %v436 = vadd.f32 0.0, %v435
    %v437 = vpop.f32.mrb[0].mxu0
    %v438 = vpop.f32.mrb[0].mxu0
    %v439 = vpop.f32.mrb[0].mxu0
    %440 = vdwg.mxu0
    %441 = vst.msk [vmem:[#allocation10] sm:$0xff] %vm106, %v387
    %442 = vst.msk [vmem:[#allocation10 + $0x8] sm:$0xff] %vm106, %v436
    // Predicated region
    $region42: #{tpu_custom_call.1} parent=1 // pred_check
      _
    $region43: #{tpu_custom_call.1} parent=1 // pred_check_branch
      %444 = sbr.rel (0) target = $region45
    $region44: #{tpu_custom_call.1} parent=1 // pred_region
      %s446 = ssub.s32 256, 256
      %447 = vsyncadd [#allocation4], %s446
      %s448 = sshll.u32 [#allocation10], 4
      %s449 = int_to_ptr.vmem [resolvable:$true] %s448
      %454 = dma.vmem_to_hbm [thread:$0]  %s449, 256, %s6, [#allocation4], 128, 128, 8
    $region45: #{tpu_custom_call.1} parent=1 // pred_fallthru
      _
    // Predicated region
    $region46: #{tpu_custom_call.1} parent=1 // pred_check
      _
    $region47: #{tpu_custom_call.1} parent=1 // pred_check_branch
      %456 = sbr.rel (0) target = $region49
    $region48: #{tpu_custom_call.1} parent=1 // pred_region
      %457 = dma.done [#allocation4], 256
    $region49: #{tpu_custom_call.1} parent=1 // pred_fallthru
      _
    %458 = vsyncpa [#allocation3], 1
    %459 = vsyncpa [#allocation6], 1
    %460 = vsyncpa [#allocation9], 1
    %461 = vsyncpa [#allocation4], 1

</llo_original>
